<compile_context>
chip_gen: v7x
topology: tpu7x:2x2x1
jax: 0.10.0
libtpu: 0.0.40
codegen_flags: <defaults>
</compile_context>

<pallas_src>
import jax
import jax.numpy as jnp
from jax.experimental import pallas as pl
from jax.experimental.pallas import tpu as pltpu

OUT_LANES = 128  # lane-dense output slab width (full vreg lane dimension)


def classifier_kernel(x_ref, w1_ref, w2_ref, params_ref, out_ref):
    n = x_ref.shape[0]
    n_hidden = w1_ref.shape[1]
    n_output = w2_ref.shape[1]

    x = x_ref[...]                                   # (N, n_input)
    p = params_ref[...]                              # (8, n_hidden) -> one vreg load
    b1 = p[0:1, :]                                   # (1, n_hidden)
    gamma = p[1:2, :]
    beta = p[2:3, :]
    b2 = p[3:4, :n_output]                           # (1, n_output)

    # layer_1: Linear(n_input, n_hidden)  (MXU, fp32 accumulate) + ReLU (VPU)
    h = jnp.dot(x, w1_ref[...], preferred_element_type=jnp.float32) + b1
    h = jnp.maximum(h, 0.0)

    # BatchNorm1d, training-mode batch stats (biased variance, eps=1e-5).
    # Single pass over h: sum and sum-of-squares, then var = E[h^2] - E[h]^2.
    inv_n = jnp.float32(1.0 / n)
    s = jnp.sum(h, axis=0, keepdims=True)            # (1, n_hidden)
    ss = jnp.sum(h * h, axis=0, keepdims=True)       # (1, n_hidden)
    mean = s * inv_n
    var = jnp.maximum(ss * inv_n - mean * mean, 0.0)
    x_out = (h - mean) * jax.lax.rsqrt(var + 1e-5) * gamma + beta   # (N, n_hidden)

    # layer_out: Linear(n_hidden, n_output)
    y = jnp.dot(x_out, w2_ref[...], preferred_element_type=jnp.float32) + b2

    # One lane-dense (N, 128) output slab: [x_out | y | zero pad] -> single unmasked store.
    pad = jnp.zeros((n, OUT_LANES - n_hidden - n_output), jnp.float32)
    out_ref[...] = jnp.concatenate([x_out, y, pad], axis=-1)


def pack_params(w1, b1, gamma, beta, w2, b2):
    """One-time layout plumbing (call once at model-build time, not per forward)."""
    n_hidden = w1.shape[0]
    n_output = w2.shape[0]
    w1_t = jnp.asarray(w1, jnp.float32).T            # (n_input, n_hidden)
    w2_t = jnp.asarray(w2, jnp.float32).T            # (n_hidden, n_output)
    params = jnp.zeros((8, n_hidden), jnp.float32)   # pad to 8 sublanes (one vreg)
    params = params.at[0, :].set(jnp.asarray(b1, jnp.float32))
    params = params.at[1, :].set(jnp.asarray(gamma, jnp.float32))
    params = params.at[2, :].set(jnp.asarray(beta, jnp.float32))
    params = params.at[3, :n_output].set(jnp.asarray(b2, jnp.float32))
    return w1_t, w2_t, params


@jax.jit
def classifier_forward(x, w1_t, w2_t, params):
    """Returns (logits, x_out) like the PyTorch module's forward."""
    n = x.shape[0]
    n_hidden = w1_t.shape[1]
    n_output = w2_t.shape[1]
    vmem = pl.BlockSpec(memory_space=pltpu.MemorySpace.VMEM)

    slab = pl.pallas_call(
        classifier_kernel,
        out_shape=jax.ShapeDtypeStruct((n, OUT_LANES), jnp.float32),
        in_specs=[vmem, vmem, vmem, vmem],
        out_specs=vmem,
    )(jnp.asarray(x, jnp.float32), w1_t, w2_t, params)

    x_out = slab[:, :n_hidden]
    y = slab[:, n_hidden:n_hidden + n_output]
    return y, x_out


def _ref_forward(x, w1, b1, gamma, beta, w2, b2):
    # pure-JAX reference of the PyTorch module (BatchNorm1d in training mode)
    h = jnp.maximum(x @ w1.T + b1, 0.0)
    mean = jnp.mean(h, axis=0, keepdims=True)
    var = jnp.mean((h - mean) ** 2, axis=0, keepdims=True)
    x_out = (h - mean) / jnp.sqrt(var + 1e-5) * gamma + beta
    y = x_out @ w2.T + b2
    return y, x_out


if __name__ == "__main__":
    # df.iloc[:, 2:8] -> n_input = 6 features
    N, n_input, n_hidden, n_output = 8, 6, 32, 2

    key = jax.random.PRNGKey(0)
    k_x, k_w1, k_b1, k_w2, k_b2 = jax.random.split(key, 5)

    x = jax.random.normal(k_x, (N, n_input), dtype=jnp.float32)

    # deterministic PyTorch-style Linear init: U(-1/sqrt(fan_in), 1/sqrt(fan_in))
    bound1 = 1.0 / jnp.sqrt(jnp.float32(n_input))
    w1 = jax.random.uniform(k_w1, (n_hidden, n_input), jnp.float32, -bound1, bound1)
    b1 = jax.random.uniform(k_b1, (n_hidden,), jnp.float32, -bound1, bound1)

    bound2 = 1.0 / jnp.sqrt(jnp.float32(n_hidden))
    w2 = jax.random.uniform(k_w2, (n_output, n_hidden), jnp.float32, -bound2, bound2)
    b2 = jax.random.uniform(k_b2, (n_output,), jnp.float32, -bound2, bound2)

    gamma = jnp.ones((n_hidden,), jnp.float32)   # BatchNorm1d weight init
    beta = jnp.zeros((n_hidden,), jnp.float32)   # BatchNorm1d bias init

    # one-time layout plumbing (pre-transposed weights, packed (8, n_hidden) params)
    w1_t, w2_t, params = pack_params(w1, b1, gamma, beta, w2, b2)

    out, x_out = classifier_forward(x, w1_t, w2_t, params)
    out = jax.block_until_ready(out)
    x_out = jax.block_until_ready(x_out)

    ref_out, ref_x_out = _ref_forward(x, w1, b1, gamma, beta, w2, b2)
    assert jnp.allclose(out, ref_out, atol=1e-4, rtol=1e-4)
    assert jnp.allclose(x_out, ref_x_out, atol=1e-4, rtol=1e-4)

    print("KERNEL_OK")
</pallas_src>

<mosaic_0001>
module attributes {stable_mosaic.version = 11 : i64} {
  func.func @classifier_kernel(%arg0: memref<8x6xf32, #tpu.memory_space<vmem>>, %arg1: memref<6x32xf32, #tpu.memory_space<vmem>>, %arg2: memref<32x2xf32, #tpu.memory_space<vmem>>, %arg3: memref<8x32xf32, #tpu.memory_space<vmem>>, %arg4: memref<8x128xf32, #tpu.memory_space<vmem>>) attributes {dimension_semantics = [], scalar_prefetch = 0 : i64, scratch_operands = 0 : i64, tpu.core_type = #tpu.core_type<tc>} {
    %c0 = arith.constant 0 : index
    %c0_0 = arith.constant 0 : index
    %0 = vector.load %arg0[%c0, %c0_0] : memref<8x6xf32, #tpu.memory_space<vmem>>, vector<8x6xf32>
    %c0_1 = arith.constant 0 : index
    %c0_2 = arith.constant 0 : index
    %1 = vector.load %arg3[%c0_1, %c0_2] : memref<8x32xf32, #tpu.memory_space<vmem>>, vector<8x32xf32>
    %2 = vector.extract_strided_slice %1 {offsets = [0, 0], sizes = [1, 32], strides = [1, 1]} : vector<8x32xf32> to vector<1x32xf32>
    %3 = vector.extract_strided_slice %1 {offsets = [1, 0], sizes = [1, 32], strides = [1, 1]} : vector<8x32xf32> to vector<1x32xf32>
    %4 = vector.extract_strided_slice %1 {offsets = [2, 0], sizes = [1, 32], strides = [1, 1]} : vector<8x32xf32> to vector<1x32xf32>
    %5 = vector.extract_strided_slice %1 {offsets = [3, 0], sizes = [1, 2], strides = [1, 1]} : vector<8x32xf32> to vector<1x2xf32>
    %c0_3 = arith.constant 0 : index
    %c0_4 = arith.constant 0 : index
    %6 = vector.load %arg1[%c0_3, %c0_4] : memref<6x32xf32, #tpu.memory_space<vmem>>, vector<6x32xf32>
    %cst = arith.constant dense<0.000000e+00> : vector<8x32xf32>
    %7 = tpu.matmul %0, %6, %cst {dimension_numbers = #tpu.dot_dimension_numbers<[1], [0], [0], [1], [0, 0, 1, 1], [], []>} : vector<8x6xf32>, vector<6x32xf32>, vector<8x32xf32> -> vector<8x32xf32>
    %8 = vector.broadcast %2 : vector<1x32xf32> to vector<8x32xf32>
    %9 = arith.addf %7, %8 : vector<8x32xf32>
    %cst_5 = arith.constant 0.000000e+00 : f32
    %10 = vector.broadcast %cst_5 : f32 to vector<8x32xf32>
    %11 = arith.maximumf %9, %10 : vector<8x32xf32>
    %cst_6 = arith.constant dense<0.000000e+00> : vector<32xf32>
    %12 = vector.multi_reduction <add>, %11, %cst_6 [0] : vector<8x32xf32> to vector<32xf32>
    %13 = vector.shape_cast %12 : vector<32xf32> to vector<1x32xf32>
    %14 = arith.mulf %11, %11 : vector<8x32xf32>
    %cst_7 = arith.constant dense<0.000000e+00> : vector<32xf32>
    %15 = vector.multi_reduction <add>, %14, %cst_7 [0] : vector<8x32xf32> to vector<32xf32>
    %16 = vector.shape_cast %15 : vector<32xf32> to vector<1x32xf32>
    %cst_8 = arith.constant 1.250000e-01 : f32
    %17 = vector.broadcast %cst_8 : f32 to vector<1x32xf32>
    %18 = arith.mulf %13, %17 : vector<1x32xf32>
    %cst_9 = arith.constant 1.250000e-01 : f32
    %19 = vector.broadcast %cst_9 : f32 to vector<1x32xf32>
    %20 = arith.mulf %16, %19 : vector<1x32xf32>
    %21 = arith.mulf %18, %18 : vector<1x32xf32>
    %22 = arith.subf %20, %21 : vector<1x32xf32>
    %cst_10 = arith.constant 0.000000e+00 : f32
    %23 = vector.broadcast %cst_10 : f32 to vector<1x32xf32>
    %24 = arith.maximumf %22, %23 : vector<1x32xf32>
    %25 = vector.broadcast %18 : vector<1x32xf32> to vector<8x32xf32>
    %26 = arith.subf %11, %25 : vector<8x32xf32>
    %cst_11 = arith.constant 9.99999974E-6 : f32
    %27 = vector.broadcast %cst_11 : f32 to vector<1x32xf32>
    %28 = arith.addf %24, %27 : vector<1x32xf32>
    %29 = math.rsqrt %28 : vector<1x32xf32>
    %30 = vector.broadcast %29 : vector<1x32xf32> to vector<8x32xf32>
    %31 = arith.mulf %26, %30 : vector<8x32xf32>
    %32 = vector.broadcast %3 : vector<1x32xf32> to vector<8x32xf32>
    %33 = arith.mulf %31, %32 : vector<8x32xf32>
    %34 = vector.broadcast %4 : vector<1x32xf32> to vector<8x32xf32>
    %35 = arith.addf %33, %34 : vector<8x32xf32>
    %c0_12 = arith.constant 0 : index
    %c0_13 = arith.constant 0 : index
    %36 = vector.load %arg2[%c0_12, %c0_13] : memref<32x2xf32, #tpu.memory_space<vmem>>, vector<32x2xf32>
    %cst_14 = arith.constant dense<0.000000e+00> : vector<8x2xf32>
    %37 = tpu.matmul %35, %36, %cst_14 {dimension_numbers = #tpu.dot_dimension_numbers<[1], [0], [0], [1], [0, 0, 1, 1], [], []>} : vector<8x32xf32>, vector<32x2xf32>, vector<8x2xf32> -> vector<8x2xf32>
    %38 = vector.broadcast %5 : vector<1x2xf32> to vector<8x2xf32>
    %39 = arith.addf %37, %38 : vector<8x2xf32>
    %cst_15 = arith.constant 0.000000e+00 : f32
    %40 = vector.broadcast %cst_15 : f32 to vector<8x94xf32>
    %41 = tpu.concatenate %35, %39, %40 in 1 : vector<8x32xf32>, vector<8x2xf32>, vector<8x94xf32> -> vector<8x128xf32>
    %c0_16 = arith.constant 0 : index
    %c0_17 = arith.constant 0 : index
    %42 = vector.load %arg4[%c0_16, %c0_17] : memref<8x128xf32, #tpu.memory_space<vmem>>, vector<8x128xf32>
    tpu.vector_store %arg4[%c0_16, %c0_17], %41 {strides = array<i32>} : memref<8x128xf32, #tpu.memory_space<vmem>>, vector<8x128xf32>,
    return
  }
}

</mosaic_0001>

<llo_original>
// kernel: classifier_forward.1
$region0: #{classifier_forward.1}
  #allocation0 [shape = 'u32[]', space=smem, size = 0x4, offset = 0x4, fixed_abs, tag = 'smem constant byte address 0x4 - core index']
  #allocation1 [shape = 'u32[144,128]{1,0:T(1,128)}', space=vmem, size = 0x12000, scoped, tag = 'internal scratch']
  %s0 = inlined_call_operand.vmem [shape: f32[8,6], index: 0, kind: input, shape index: {}]
  %s1 = inlined_call_operand.vmem [shape: f32[6,32], index: 1, kind: input, shape index: {}]
  %s2 = inlined_call_operand.vmem [shape: f32[32,2], index: 2, kind: input, shape index: {}]
  %s3 = inlined_call_operand.vmem [shape: f32[8,32], index: 3, kind: input, shape index: {}]
  %s4 = inlined_call_operand.vmem [shape: f32[8,128], index: 4, kind: output, shape index: {}]
  %s5 = sld [smem:[#allocation0]]
  $region26: #{classifier_forward.1} parent=0
    _
  %s7 = ssub.s32 1, %s5
  %s8 = scalar_select 0, %s7, %s5
  // Predicated region
  $region2: #{classifier_forward.1} parent=0 // pred_check
    _
  $region3: #{classifier_forward.1} parent=0 // pred_check_branch
    %10 = sbr.rel (0) target = $region5
  $region4: #{classifier_forward.1} parent=0 // pred_region
    _
  $region5: #{classifier_forward.1} parent=0 // pred_fallthru
    _
  // Predicated region
  $region6: #{classifier_forward.1} parent=0 // pred_check
    _
  $region7: #{classifier_forward.1} parent=0 // pred_check_branch
    %12 = sbr.rel (0) target = $region9
  $region8: #{classifier_forward.1} parent=0 // pred_region
    _
  $region9: #{classifier_forward.1} parent=0 // pred_fallthru
    _
  // Predicated region
  $region10: #{classifier_forward.1} parent=0 // pred_check
    _
  $region11: #{classifier_forward.1} parent=0 // pred_check_branch
    %14 = sbr.rel (0) target = $region13
  $region12: #{classifier_forward.1} parent=0 // pred_region
    _
  $region13: #{classifier_forward.1} parent=0 // pred_fallthru
    _
  // Predicated region
  $region14: #{classifier_forward.1} parent=0 // pred_check
    _
  $region15: #{classifier_forward.1} parent=0 // pred_check_branch
    %16 = sbr.rel (0) target = $region17
  $region16: #{classifier_forward.1} parent=0 // pred_region
    _
  $region17: #{classifier_forward.1} parent=0 // pred_fallthru
    _
  %v17 = vld [vmem:[%s0] sm:$0xff]
  %v18 = vld [vmem:[%s3] sm:$0xff]
  %v19 = vld [vmem:[%s1] sm:$0x3f]
  %v20 = vlaneseq
  %v21 = vshrl.u32 %v20, 7
  %v22 = vsub.s32 0, %v21
  %v23 = vrot.slane %v18, %v22
  %vm24 = vcmask 48128
  %v26 = vsel %vm24, %v17, 0
  %vm28 = vcmask 1045504
  %v30 = vsel %vm28, %v19, 0
  %32 = vmatprep.subr.mxu0 0.0
  %33 = vmatpush1.msra.mxu0 %v30
  %34 = vmatprep.subr.mxu0 0.0
  %35 = vmatpush1.msra.mxu0 0.0
  %36 = vmatprep.subr.mxu0 0.0
  %37 = vmatpush1.msra.mxu0 0.0
  %38 = vmatprep.subr.mxu0 0.0
  %39 = vmatpush1.msra.mxu0 0.0
  %40 = vmatprep.subr.mxu0 0.0
  %41 = vmatpush1.msra.mxu0 0.0
  %42 = vmatprep.subr.mxu0 0.0
  %43 = vmatpush1.msra.mxu0 0.0
  %44 = vmatprep.subr.mxu0 0.0
  %45 = vmatpush1.msra.mxu0 0.0
  %46 = vmatprep.subr.mxu0 0.0
  %47 = vmatpush1.msra.mxu0 0.0
  %48 = vmatprep.subr.mxu0 0.0
  %49 = vmatpush1.msra.mxu0 0.0
  %50 = vmatprep.subr.mxu0 0.0
  %51 = vmatpush1.msra.mxu0 0.0
  %52 = vmatprep.subr.mxu0 0.0
  %53 = vmatpush1.msra.mxu0 0.0
  %54 = vmatprep.subr.mxu0 0.0
  %55 = vmatpush1.msra.mxu0 0.0
  %56 = vmatprep.subr.mxu0 0.0
  %57 = vmatpush1.msra.mxu0 0.0
  %58 = vmatprep.subr.mxu0 0.0
  %59 = vmatpush1.msra.mxu0 0.0
  %60 = vmatprep.subr.mxu0 0.0
  %61 = vmatpush1.msra.mxu0 0.0
  %62 = vmatprep.subr.mxu0 0.0
  %63 = vmatpush1.msra.mxu0 0.0
  %64 = vmatprep.subr.mxu0 0.0
  %65 = vmatpush1.msra.mxu0 0.0
  %66 = vmatprep.subr.mxu0 0.0
  %67 = vmatpush1.msra.mxu0 0.0
  %68 = vmatprep.subr.mxu0 0.0
  %69 = vmatpush1.msra.mxu0 0.0
  %70 = vmatprep.subr.mxu0 0.0
  %71 = vmatpush1.msra.mxu0 0.0
  %72 = vmatprep.subr.mxu0 0.0
  %73 = vmatpush1.msra.mxu0 0.0
  %74 = vmatprep.subr.mxu0 0.0
  %75 = vmatpush1.msra.mxu0 0.0
  %76 = vmatprep.subr.mxu0 0.0
  %77 = vmatpush1.msra.mxu0 0.0
  %78 = vmatprep.subr.mxu0 0.0
  %79 = vmatpush1.msra.mxu0 0.0
  %80 = vmatprep.subr.mxu0 0.0
  %81 = vmatpush1.msra.mxu0 0.0
  %82 = vmatprep.subr.mxu0 0.0
  %83 = vmatpush1.msra.mxu0 0.0
  %84 = vmatprep.subr.mxu0 0.0
  %85 = vmatpush1.msra.mxu0 0.0
  %86 = vmatprep.subr.mxu0 0.0
  %87 = vmatpush1.msra.mxu0 0.0
  %88 = vmatprep.subr.mxu0 0.0
  %89 = vmatpush1.msra.mxu0 0.0
  %90 = vmatprep.subr.mxu0 0.0
  %91 = vmatpush1.msra.mxu0 0.0
  %92 = vmatprep.subr.mxu0 0.0
  %93 = vmatpush1.msra.mxu0 0.0
  %94 = vmatprep.subr.mxu0 0.0
  %95 = vmatpush1.msra.mxu0 0.0
  %96 = vmatprep.mubr.f32.mxu0 0.0
  %97 = vmatmul.mubr.f32.gmra.mrb[0].mxu0 %v26
  %v98 = vpop.f32.mrb[0].mxu0
  %v99 = vadd.f32 %v23, %v98
  %v100 = vpop.f32.mrb[0].mxu0
  %101 = vdwg.mxu0
  %v102 = vmax.f32 %v99, 0.0
  %vm103 = vcmask 261120
  %v104 = vsel %vm103, %v102, 0.0
  %v105 = vrot.slane %v104, 4
  %v106 = vadd.f32 %v104, %v105
  %v107 = vrot.slane %v106, 2
  %v108 = vadd.f32 %v106, %v107
  %v109 = vrot.slane %v108, 1
  %v110 = vadd.f32 %v108, %v109
  %v111 = vmul.f32 %v102, %v102
  %v112 = vsel %vm103, %v111, 0.0
  %v113 = vrot.slane %v112, 4
  %v114 = vadd.f32 %v112, %v113
  %v115 = vrot.slane %v114, 2
  %v116 = vadd.f32 %v114, %v115
  %v117 = vrot.slane %v116, 1
  %v118 = vadd.f32 %v116, %v117
  %v119 = vmul.f32 %v110, 0.125
  %v120 = vmul.f32 %v118, 0.125
  %v121 = vmul.f32 %v119, %v119
  %v122 = vsub.f32 %v120, %v121
  %v123 = vmax.f32 %v122, 0.0
  %v124 = vsub.f32 %v102, %v119
  %v125 = vadd.f32 %v123, 1e-05
  %v126 = vrsqrt.pop %v125
  %v127 = vmul.f32 %v124, %v126
  %v128 = vlaneseq
  %v129 = vshrl.u32 %v128, 7
  %v130 = vsub.s32 1, %v129
  %v131 = vrot.slane %v18, %v130
  %v132 = vmul.f32 %v127, %v131
  %v133 = vlaneseq
  %v134 = vshrl.u32 %v133, 7
  %v135 = vsub.s32 2, %v134
  %v136 = vrot.slane %v18, %v135
  %v137 = vadd.f32 %v132, %v136
  %v138 = vld [vmem:[%s2] sm:$0xff]
  %v139 = vld [vmem:[%s2 + $0x8] sm:$0xff]
  %v140 = vld [vmem:[%s2 + $0x10] sm:$0xff]
  %v141 = vld [vmem:[%s2 + $0x18] sm:$0xff]
  %v142 = vlaneseq
  %v143 = vshrl.u32 %v142, 7
  %v144 = vsub.s32 3, %v143
  %v145 = vrot.slane %v18, %v144
  %v147 = vsel %vm103, %v137, 0
  %149 = vmatprep.subr.mxu0 0.0
  %150 = vmatpush1.msra.mxu0 %v138
  %151 = vmatprep.subr.mxu0 0.0
  %152 = vmatpush1.msra.mxu0 %v139
  %153 = vmatprep.subr.mxu0 0.0
  %154 = vmatpush1.msra.mxu0 %v140
  %155 = vmatprep.subr.mxu0 0.0
  %156 = vmatpush1.msra.mxu0 %v141
  %157 = vmatprep.subr.mxu0 0.0
  %158 = vmatpush1.msra.mxu0 0.0
  %159 = vmatprep.subr.mxu0 0.0
  %160 = vmatpush1.msra.mxu0 0.0
  %161 = vmatprep.subr.mxu0 0.0
  %162 = vmatpush1.msra.mxu0 0.0
  %163 = vmatprep.subr.mxu0 0.0
  %164 = vmatpush1.msra.mxu0 0.0
  %165 = vmatprep.subr.mxu0 0.0
  %166 = vmatpush1.msra.mxu0 0.0
  %167 = vmatprep.subr.mxu0 0.0
  %168 = vmatpush1.msra.mxu0 0.0
  %169 = vmatprep.subr.mxu0 0.0
  %170 = vmatpush1.msra.mxu0 0.0
  %171 = vmatprep.subr.mxu0 0.0
  %172 = vmatpush1.msra.mxu0 0.0
  %173 = vmatprep.subr.mxu0 0.0
  %174 = vmatpush1.msra.mxu0 0.0
  %175 = vmatprep.subr.mxu0 0.0
  %176 = vmatpush1.msra.mxu0 0.0
  %177 = vmatprep.subr.mxu0 0.0
  %178 = vmatpush1.msra.mxu0 0.0
  %179 = vmatprep.subr.mxu0 0.0
  %180 = vmatpush1.msra.mxu0 0.0
  %181 = vmatprep.subr.mxu0 0.0
  %182 = vmatpush1.msra.mxu0 0.0
  %183 = vmatprep.subr.mxu0 0.0
  %184 = vmatpush1.msra.mxu0 0.0
  %185 = vmatprep.subr.mxu0 0.0
  %186 = vmatpush1.msra.mxu0 0.0
  %187 = vmatprep.subr.mxu0 0.0
  %188 = vmatpush1.msra.mxu0 0.0
  %189 = vmatprep.subr.mxu0 0.0
  %190 = vmatpush1.msra.mxu0 0.0
  %191 = vmatprep.subr.mxu0 0.0
  %192 = vmatpush1.msra.mxu0 0.0
  %193 = vmatprep.subr.mxu0 0.0
  %194 = vmatpush1.msra.mxu0 0.0
  %195 = vmatprep.subr.mxu0 0.0
  %196 = vmatpush1.msra.mxu0 0.0
  %197 = vmatprep.subr.mxu0 0.0
  %198 = vmatpush1.msra.mxu0 0.0
  %199 = vmatprep.subr.mxu0 0.0
  %200 = vmatpush1.msra.mxu0 0.0
  %201 = vmatprep.subr.mxu0 0.0
  %202 = vmatpush1.msra.mxu0 0.0
  %203 = vmatprep.subr.mxu0 0.0
  %204 = vmatpush1.msra.mxu0 0.0
  %205 = vmatprep.subr.mxu0 0.0
  %206 = vmatpush1.msra.mxu0 0.0
  %207 = vmatprep.subr.mxu0 0.0
  %208 = vmatpush1.msra.mxu0 0.0
  %209 = vmatprep.subr.mxu0 0.0
  %210 = vmatpush1.msra.mxu0 0.0
  %211 = vmatprep.subr.mxu0 0.0
  %212 = vmatpush1.msra.mxu0 0.0
  %213 = vmatprep.mubr.f32.mxu0 0.0
  %214 = vmatmul.mubr.f32.gmra.mrb[0].mxu0 %v147
  %v215 = vpop.f32.mrb[0].mxu0
  %v216 = vadd.f32 %v145, %v215
  %v217 = vpop.f32.mrb[0].mxu0
  %218 = vdwg.mxu0
  %220 = vrot.lane.b32.xlu0 %v216, 32
  %v221 = vpop.permute.xlu0 %220
  %v223 = vsel %vm103, %v137, %v221
  %vm224 = vcmask 277504
  %v225 = vsel %vm224, %v223, 0.0
  %226 = vst [vmem:[%s4] sm:$0xff] %v225
  // Predicated region
  $region18: #{classifier_forward.1} parent=0 // pred_check
    _
  $region19: #{classifier_forward.1} parent=0 // pred_check_branch
    %228 = sbr.rel (0) target = $region21
  $region20: #{classifier_forward.1} parent=0 // pred_region
    _
  $region21: #{classifier_forward.1} parent=0 // pred_fallthru
    _
  // Predicated region
  $region22: #{classifier_forward.1} parent=0 // pred_check
    _
  $region23: #{classifier_forward.1} parent=0 // pred_check_branch
    %230 = sbr.rel (0) target = $region25
  $region24: #{classifier_forward.1} parent=0 // pred_region
    _
  $region25: #{classifier_forward.1} parent=0 // pred_fallthru
    _

</llo_original>
